<compile_context>
chip_gen: v6e
topology: v6e:2x2x1
jax: 0.10.0
libtpu: 0.0.40
codegen_flags: <defaults>
</compile_context>

<pallas_src>
import math

import jax
import jax.numpy as jnp
from jax.experimental import pallas as pl
from jax.experimental.pallas import tpu as pltpu


# ---------------------------------------------------------------------------
# Kernel
# ---------------------------------------------------------------------------
def _make_kernel(k_total, tk):
    """Kernel closure over the static feature size K and the K-tile TK."""
    ragged_k = (k_total % tk) != 0

    def classifier_kernel(x_ref, w_ref, b_ref, o_ref, acc_ref):
        # x_ref: (TB, TK)  activations (raw flattened NCHW rows)
        # w_ref: (1, TK)   pool-folded Linear weight (resident across B tiles)
        # b_ref: (1, 1)    Linear bias, SMEM scalar
        # o_ref: (1, TB)   sigmoid probabilities, batch on the lane axis
        # acc_ref: (1, TB) f32 partial-sum accumulator (VMEM scratch)
        k = pl.program_id(1)

        @pl.when(k == 0)
        def _init():
            acc_ref[...] = jnp.zeros_like(acc_ref)

        x = x_ref[...]
        w = w_ref[...]
        if ragged_k:
            # Mask the out-of-range tail of the last K block on BOTH operands:
            # stale VMEM beyond K could hold NaN bit patterns, and NaN*0 = NaN.
            col = jax.lax.broadcasted_iota(jnp.int32, (1, tk), 1) + k * tk
            valid = col < k_total
            x = jnp.where(valid, x, jnp.zeros_like(x))
            w = jnp.where(valid, w, jnp.zeros_like(w))

        # GEMV as (1,TK) x (TB,TK) contracting K -> lane-dense (1,TB) block.
        # (Canonical transposed-RHS MXU form; no materialized transpose of x.)
        acc_ref[...] += jax.lax.dot_general(
            w, x,
            dimension_numbers=(((1,), (1,)), ((), ())),
            preferred_element_type=jnp.float32,
        )

        @pl.when(k == pl.num_programs(1) - 1)
        def _finalize():
            # Dropout(p=0.4) is identity at inference time -- nothing to do.
            o_ref[...] = jax.nn.sigmoid(
                acc_ref[...] + b_ref[0, 0]).astype(o_ref.dtype)

    return classifier_kernel


# ---------------------------------------------------------------------------
# Tiling / VMEM budgeting
# ---------------------------------------------------------------------------
def _round_up(n, m):
    return -(-n // m) * m


def _vmem_capacity_bytes():
    """Generation-aware VMEM capacity (v5e/v6e: 128 MiB, v7x: 64 MiB per TC)."""
    try:
        return int(pltpu.get_tpu_info().vmem_capacity_bytes)
    except Exception:
        return 64 * 1024 * 1024  # conservative fallback (v7x per-TC)


def _choose_tiles(B, K, itemsize):
    """Pick (TB, TK, vmem_limit_bytes).

    Targets ~8 MiB of x DMA per grid step (per-step overhead <10%, >=85% of the
    HBM roofline) while keeping the double-buffered working set well inside the
    per-generation VMEM capacity.  Falls back to K-tiling (reduction axis) when
    even a 128-row block of the full feature dim would not fit the budget."""
    cap = _vmem_capacity_bytes()
    budget = min(8 * 1024 * 1024, cap // 8)  # per-step x-tile bytes

    if 128 * K * itemsize <= budget or B * K * itemsize <= budget:
        # Full feature dim fits in one block -> no reduction tiling.
        tk = K
        tb_cap = max(1, budget // (K * itemsize))
        if B <= tb_cap or B <= 128:
            tb = B  # single full-batch tile (block dims == array dims)
        else:
            tb_max = max(128, min(4096, (tb_cap // 128) * 128))
            tb = tb_max
            # v7x: prefer an even number of batch tiles so the "parallel" batch
            # axis splits evenly across both TensorCores (no-op on v5e/v6e).
            if pl.cdiv(B, tb) % 2 == 1:
                cand = tb_max
                while cand >= max(128, tb_max // 2):
                    if pl.cdiv(B, cand) % 2 == 0:
                        tb = cand
                        break
                    cand -= 128
    else:
        # K too large for a (128, K) block -> tile the reduction axis.
        tb = B if B <= 512 else 512
        tk = max(128, (budget // (tb * itemsize)) // 128 * 128)
        if tk >= K:
            tk = K

    # Explicit scoped-VMEM limit sized from the chosen tiles (x and w are
    # double-buffered by the pipeline; the (1,TB) out/acc are tiny).
    working_set = 2 * (tb * tk + tk) * itemsize + 3 * tb * 4
    vmem_limit = min(cap * 3 // 4,
                     max(working_set + 8 * 1024 * 1024, 16 * 1024 * 1024))
    return tb, tk, int(vmem_limit)


# ---------------------------------------------------------------------------
# One-time weight prep (hoisted out of the per-call path)
# ---------------------------------------------------------------------------
def fold_pool_into_linear_weight(w, ch_in, H, W, dtype=None):
    """Fold AvgPool2d(2,2) (and its 1/4 scale) into the Linear weight so the
    kernel consumes the raw NCHW image directly.

    w: (F, 1) with F = ch_in*(H//2)*(W//2)  (transposed vs PyTorch's (1, F))
    Returns w_full: (1, ch_in * 2*(H//2) * 2*(W//2))."""
    Ho, Wo = H // 2, W // 2
    assert w.shape == (ch_in * Ho * Wo, 1)
    w3 = w.reshape(ch_in, Ho, Wo)
    w_full = (0.25 * jnp.broadcast_to(
        w3[:, :, None, :, None], (ch_in, Ho, 2, Wo, 2))).reshape(1, -1)
    if dtype is not None:
        w_full = w_full.astype(dtype)
    return w_full


# ---------------------------------------------------------------------------
# Forward
# ---------------------------------------------------------------------------
@jax.jit
def classifier_forward(img, w_full, b):
    """img: NCHW (float32 or bfloat16). w_full: (1, C*Hc*Wc) pre-folded weight.
    b: (1, 1) bias. Returns (B, 1) sigmoid probabilities (matches PyTorch)."""
    B, C, H, W = img.shape
    Hc, Wc = (H // 2) * 2, (W // 2) * 2
    if (Hc, Wc) != (H, W):
        # PyTorch AvgPool2d(2,2) floor-drops the trailing odd row/column.
        img = img[:, :, :Hc, :Wc]
    K = C * Hc * Wc
    assert w_full.shape == (1, K)

    x = img.reshape(B, K)          # free reshape of contiguous NCHW (even H,W)
    w_full = w_full.astype(x.dtype)  # no-op for matching dtypes; tiny otherwise
    itemsize = x.dtype.itemsize

    TB, TK, vmem_limit = _choose_tiles(B, K, itemsize)
    grid = (pl.cdiv(B, TB), pl.cdiv(K, TK))   # reduction (K) axis last

    out = pl.pallas_call(
        _make_kernel(K, TK),
        out_shape=jax.ShapeDtypeStruct((1, B), jnp.float32),
        grid_spec=pltpu.PrefetchScalarGridSpec(
            num_scalar_prefetch=0,
            grid=grid,
            in_specs=[
                pl.BlockSpec((TB, TK), lambda i, k: (i, k)),   # x: B- and K-tiled
                pl.BlockSpec((1, TK), lambda i, k: (0, k)),    # w: B-resident
                pl.BlockSpec(memory_space=pltpu.MemorySpace.SMEM),  # bias scalar
            ],
            out_specs=pl.BlockSpec((1, TB), lambda i, k: (0, i)),   # lane-dense
            scratch_shapes=[pltpu.VMEM((1, TB), jnp.float32)],      # accumulator
        ),
        compiler_params=pltpu.CompilerParams(
            dimension_semantics=("parallel", "arbitrary"),
            vmem_limit_bytes=vmem_limit,
        ),
        cost_estimate=pl.CostEstimate(
            flops=2 * B * K,
            transcendentals=B,
            bytes_accessed=(B * K + K) * itemsize + (B + 1) * 4,
        ),
    )(x, w_full, b)

    return out[0, :].reshape(B, 1)  # back to PyTorch's (B, 1)


if __name__ == "__main__":
    # Small shapes consistent with the module: feature_size=16, ch_in=4, batch=2
    B, C, H = 2, 4, 16
    Ho = H // 2
    F = C * Ho * Ho  # 256 = flattened feature size after the 2x2 avg-pool

    key = jax.random.PRNGKey(0)
    k_img, k_w, k_b = jax.random.split(key, 3)

    img = jax.random.normal(k_img, (B, C, H, H), dtype=jnp.float32)

    # Deterministic Linear(F, 1) init (PyTorch-style uniform +/- 1/sqrt(fan_in))
    bound = 1.0 / math.sqrt(F)
    w = jax.random.uniform(k_w, (F, 1), minval=-bound, maxval=bound,
                           dtype=jnp.float32)
    b = jax.random.uniform(k_b, (1, 1), minval=-bound, maxval=bound,
                           dtype=jnp.float32)

    # One-time weight prep (outside the per-call jit path).
    w_full = fold_pool_into_linear_weight(w, C, H, H)

    out = classifier_forward(img, w_full, b)
    out = jax.block_until_ready(out)

    # Pure-JAX reference of the same forward pass
    pooled_ref = img.reshape(B, C, Ho, 2, Ho, 2).mean(axis=(3, 5)).reshape(B, -1)
    ref = jax.nn.sigmoid(pooled_ref @ w + b)
    assert out.shape == (B, 1)
    assert jnp.allclose(out, ref, atol=1e-5, rtol=1e-5)

    print("KERNEL_OK")
</pallas_src>

<mosaic_0001>
module attributes {stable_mosaic.version = 11 : i64} {
  func.func @classifier_kernel(%arg0: i32, %arg1: i32, %arg2: memref<2x1024xf32, #tpu.memory_space<vmem>>, %arg3: memref<1x1024xf32, #tpu.memory_space<vmem>>, %arg4: memref<1x1xf32, #tpu.memory_space<smem>>, %arg5: memref<1x2xf32, #tpu.memory_space<vmem>>, %arg6: memref<1x2xf32, #tpu.memory_space<vmem>>) attributes {dimension_semantics = [#tpu.dimension_semantics<parallel>, #tpu.dimension_semantics<arbitrary>], iteration_bounds = array<i64: 1, 1>, scalar_prefetch = 0 : i64, scratch_operands = 1 : i64, tpu.core_type = #tpu.core_type<tc>, window_params = [{transform_indices = @transform_0, window_bounds = array<i64: 2, 1024>}, {transform_indices = @transform_1, window_bounds = array<i64: 1, 1024>}, {transform_indices = @transform_2, window_bounds = array<i64: 1, 1>}, {transform_indices = @transform_3, window_bounds = array<i64: 1, 2>}]} {
    %c0_i32 = arith.constant 0 : i32
    %0 = arith.cmpi eq, %arg1, %c0_i32 : i32
    %1 = arith.extui %0 : i1 to i32
    %c0_i32_0 = arith.constant 0 : i32
    %2 = arith.cmpi ne, %1, %c0_i32_0 : i32
    scf.if %2 {
      %cst_10 = arith.constant 0.000000e+00 : f32
      %12 = vector.broadcast %cst_10 : f32 to vector<1x2xf32>
      %c0_11 = arith.constant 0 : index
      %c0_12 = arith.constant 0 : index
      %13 = vector.load %arg6[%c0_11, %c0_12] : memref<1x2xf32, #tpu.memory_space<vmem>>, vector<1x2xf32>
      tpu.vector_store %arg6[%c0_11, %c0_12], %12 {strides = array<i32>} : memref<1x2xf32, #tpu.memory_space<vmem>>, vector<1x2xf32>,
    } else {
    }
    %c0 = arith.constant 0 : index
    %c0_1 = arith.constant 0 : index
    %3 = vector.load %arg2[%c0, %c0_1] : memref<2x1024xf32, #tpu.memory_space<vmem>>, vector<2x1024xf32>
    %c0_2 = arith.constant 0 : index
    %c0_3 = arith.constant 0 : index
    %4 = vector.load %arg3[%c0_2, %c0_3] : memref<1x1024xf32, #tpu.memory_space<vmem>>, vector<1x1024xf32>
    %c0_4 = arith.constant 0 : index
    %c0_5 = arith.constant 0 : index
    %5 = vector.load %arg6[%c0_4, %c0_5] : memref<1x2xf32, #tpu.memory_space<vmem>>, vector<1x2xf32>
    %cst = arith.constant dense<0.000000e+00> : vector<1x2xf32>
    %6 = tpu.matmul %4, %3, %cst {dimension_numbers = #tpu.dot_dimension_numbers<[1], [1], [0], [0], [0, 0, 1, 0], [], []>} : vector<1x1024xf32>, vector<2x1024xf32>, vector<1x2xf32> -> vector<1x2xf32>
    %7 = arith.addf %5, %6 : vector<1x2xf32>
    %c0_6 = arith.constant 0 : index
    %c0_7 = arith.constant 0 : index
    %8 = vector.load %arg6[%c0_6, %c0_7] : memref<1x2xf32, #tpu.memory_space<vmem>>, vector<1x2xf32>
    tpu.vector_store %arg6[%c0_6, %c0_7], %7 {strides = array<i32>} : memref<1x2xf32, #tpu.memory_space<vmem>>, vector<1x2xf32>,
    %c0_i32_8 = arith.constant 0 : i32
    %9 = arith.cmpi eq, %arg1, %c0_i32_8 : i32
    %10 = arith.extui %9 : i1 to i32
    %c0_i32_9 = arith.constant 0 : i32
    %11 = arith.cmpi ne, %10, %c0_i32_9 : i32
    scf.if %11 {
      %c0_10 = arith.constant 0 : index
      %c0_11 = arith.constant 0 : index
      %12 = vector.load %arg6[%c0_10, %c0_11] : memref<1x2xf32, #tpu.memory_space<vmem>>, vector<1x2xf32>
      %c0_12 = arith.constant 0 : index
      %c0_13 = arith.constant 0 : index
      %13 = memref.load %arg4[%c0_12, %c0_13] : memref<1x1xf32, #tpu.memory_space<smem>>
      %14 = vector.broadcast %13 : f32 to vector<1x2xf32>
      %15 = arith.addf %12, %14 : vector<1x2xf32>
      %16 = arith.negf %15 : vector<1x2xf32>
      %17 = math.exp %16 : vector<1x2xf32>
      %cst_14 = arith.constant 1.000000e+00 : f32
      %18 = vector.broadcast %cst_14 : f32 to vector<1x2xf32>
      %19 = arith.addf %18, %17 : vector<1x2xf32>
      %20 = arith.divf %18, %19 : vector<1x2xf32>
      %c0_15 = arith.constant 0 : index
      %c0_16 = arith.constant 0 : index
      %21 = vector.load %arg5[%c0_15, %c0_16] : memref<1x2xf32, #tpu.memory_space<vmem>>, vector<1x2xf32>
      tpu.vector_store %arg5[%c0_15, %c0_16], %20 {strides = array<i32>} : memref<1x2xf32, #tpu.memory_space<vmem>>, vector<1x2xf32>,
    } else {
    }
    return
  }
  func.func @transform_0(%arg0: i32, %arg1: i32) -> (i32, i32) {
    %c0_i32 = arith.constant 0 : i32
    return %arg0, %arg1 : i32, i32
  }
  func.func @transform_1(%arg0: i32, %arg1: i32) -> (i32, i32) {
    %c0_i32 = arith.constant 0 : i32
    %c0_i32_0 = arith.constant 0 : i32
    return %c0_i32, %arg1 : i32, i32
  }
  func.func @transform_2(%arg0: i32, %arg1: i32) -> (i32, i32) {
    %c0_i32 = arith.constant 0 : i32
    %c0_i32_0 = arith.constant 0 : i32
    %c0_i32_1 = arith.constant 0 : i32
    return %c0_i32, %c0_i32_0 : i32, i32
  }
  func.func @transform_3(%arg0: i32, %arg1: i32) -> (i32, i32) {
    %c0_i32 = arith.constant 0 : i32
    %c0_i32_0 = arith.constant 0 : i32
    return %c0_i32, %arg0 : i32, i32
  }
}

</mosaic_0001>

<llo_original>
// kernel: classifier_forward.1
$region0: #{classifier_forward.1}
  #allocation0 [shape = 'u32[]', space=smem, size = 0x4, offset = 0x4, fixed_abs, tag = 'smem constant byte address 0x4 - core index']
  #allocation1 [shape = 'u32[144,128]{1,0:T(1,128)}', space=vmem, size = 0x12000, scoped, tag = 'internal scratch']
  #allocation2 [shape = 'f32[1,2]{1,0:T(1,128)}', space=vmem, size = 0x200, scoped, tag = 'scratch operand']
  #allocation3 [shape = 'f32[1,1]{1,0:T(1,128)S(6)}', space=smem, size = 0x200, scoped, tag = 'scoped memory for classifier_forward.1']
  %s0 = inlined_call_operand.vmem [shape: f32[2,1024], index: 0, kind: input, shape index: {}]
  %s1 = inlined_call_operand.vmem [shape: f32[1,1024], index: 1, kind: input, shape index: {}]
  %s2 = inlined_call_operand.<no memory space> [shape: f32[1,1], index: 2, kind: input, shape index: {}]
  %s3 = inlined_call_operand.hbm [shape: f32[1,2], index: 3, kind: output, shape index: {}]
  %s4 = sld [smem:[#allocation0]]
  $region30: #{classifier_forward.1} parent=0
    _
  %s6 = ssub.s32 1, %s4
  %s7 = scalar_select 0, %s6, %s4
  %8 = sst [smem:[#allocation3]] %s2
  $region1: #{classifier_forward.1} parent=0
    #allocation4 [shape = 'u8[512]{0}', space=vmem, size = 0x400, scoped, tag = 'output window, operand 0, single buffered']
    #allocation5 [shape = 's32[1]{0}', space=sflag, size = 0x4, scoped, tag = 'scoped memory for classifier_forward.1']
    %9 = vsyncpa [#allocation5], 0
    // Predicated region
    $region2: #{classifier_forward.1} parent=1 // pred_check
      _
    $region3: #{classifier_forward.1} parent=1 // pred_check_branch
      %11 = sbr.rel (0) target = $region5
    $region4: #{classifier_forward.1} parent=1 // pred_region
      _
    $region5: #{classifier_forward.1} parent=1 // pred_fallthru
      _
    // Predicated region
    $region6: #{classifier_forward.1} parent=1 // pred_check
      _
    $region7: #{classifier_forward.1} parent=1 // pred_check_branch
      %13 = sbr.rel (0) target = $region9
    $region8: #{classifier_forward.1} parent=1 // pred_region
      _
    $region9: #{classifier_forward.1} parent=1 // pred_fallthru
      _
    // Predicated region
    $region10: #{classifier_forward.1} parent=1 // pred_check
      _
    $region11: #{classifier_forward.1} parent=1 // pred_check_branch
      %15 = sbr.rel (0) target = $region13
    $region12: #{classifier_forward.1} parent=1 // pred_region
      _
    $region13: #{classifier_forward.1} parent=1 // pred_fallthru
      _
    %p16 = scmp.eq.s32.totalorder 0, 0
    // Predicated region
    $region14: #{classifier_forward.1} parent=1 // pred_check
      %p17 = pneg %p16
    $region15: #{classifier_forward.1} parent=1 // pred_check_branch
      %19 = sbr.rel (%p17) target = $region17
    $region16: #{classifier_forward.1} parent=1 // pred_region
      %vm20 = vcmask 8192
      %21 = vst.msk [vmem:[#allocation2] sm:$0x1] %vm20, 0.0
    $region17: #{classifier_forward.1} parent=1 // pred_fallthru
      _
    %v22 = vld [vmem:[%s0] sm:$0xff]
    %v23 = vld [vmem:[%s0 + $0x8] sm:$0xff]
    %v24 = vld [vmem:[%s1] sm:$0xff]
    %v25 = vld [vmem:[#allocation2] sm:$0x1]
    %v27 = vlaneseq
    %v28 = vshrl.u32 %v27, 7
    %v29 = vsub.s32 0, %v28
    %v30 = vrot.slane %v24, %v29
    %v31 = vlaneseq
    %v32 = vshrl.u32 %v31, 7
    %v33 = vsub.s32 1, %v32
    %v34 = vrot.slane %v24, %v33
    %v35 = vlaneseq
    %v36 = vshrl.u32 %v35, 7
    %v37 = vsub.s32 2, %v36
    %v38 = vrot.slane %v24, %v37
    %v39 = vlaneseq
    %v40 = vshrl.u32 %v39, 7
    %v41 = vsub.s32 3, %v40
    %v42 = vrot.slane %v24, %v41
    %v43 = vlaneseq
    %v44 = vshrl.u32 %v43, 7
    %v45 = vsub.s32 4, %v44
    %v46 = vrot.slane %v24, %v45
    %v47 = vlaneseq
    %v48 = vshrl.u32 %v47, 7
    %v49 = vsub.s32 5, %v48
    %v50 = vrot.slane %v24, %v49
    %v51 = vlaneseq
    %v52 = vshrl.u32 %v51, 7
    %v53 = vsub.s32 6, %v52
    %v54 = vrot.slane %v24, %v53
    %v55 = vlaneseq
    %v56 = vshrl.u32 %v55, 7
    %v57 = vsub.s32 7, %v56
    %v58 = vrot.slane %v24, %v57
    %v69 = vcombine.high %v22, %v22
    %v71 = vunpack.c.l.s4 1983009808
    %v72 = vunpack.c.0.s8 %v71
    %v73 = vlaneseq
    %v74 = vshrl.u32 %v73, 7
    %v75 = vsub.s32 %v72, %v74
    %v76 = vrot.slane %v22, %v75
    %v78 = vunpack.c.l.s4 1983009808
    %v79 = vunpack.c.0.s8 %v78
    %v80 = vlaneseq
    %v81 = vshrl.u32 %v80, 7
    %v82 = vsub.s32 %v79, %v81
    %v83 = vrot.slane %v69, %v82
    %v84 = vcombine.high %v76, %v76
    %v85 = vcombine.high %v83, %v83
    %v86 = vcombine.high %v23, %v23
    %v88 = vunpack.c.l.s4 1983009808
    %v89 = vunpack.c.0.s8 %v88
    %v90 = vlaneseq
    %v91 = vshrl.u32 %v90, 7
    %v92 = vsub.s32 %v89, %v91
    %v93 = vrot.slane %v23, %v92
    %v95 = vunpack.c.l.s4 1983009808
    %v96 = vunpack.c.0.s8 %v95
    %v97 = vlaneseq
    %v98 = vshrl.u32 %v97, 7
    %v99 = vsub.s32 %v96, %v98
    %v100 = vrot.slane %v86, %v99
    %v101 = vcombine.high %v93, %v93
    %v102 = vcombine.high %v100, %v100
    %111 = vmatprep.subr.mxu0 0.0
    %112 = vmatpush1.xpose.msra.mxu0 0.0
    %113 = vmatprep.subr.mxu0 0.0
    %114 = vmatpush1.xpose.msra.mxu0 0.0
    %115 = vmatprep.subr.mxu0 0.0
    %116 = vmatpush1.xpose.msra.mxu0 0.0
    %117 = vmatprep.subr.mxu0 0.0
    %118 = vmatpush1.xpose.msra.mxu0 0.0
    %119 = vmatprep.subr.mxu0 0.0
    %120 = vmatpush1.xpose.msra.mxu0 0.0
    %121 = vmatprep.subr.mxu0 0.0
    %122 = vmatpush1.xpose.msra.mxu0 0.0
    %123 = vmatprep.subr.mxu0 0.0
    %124 = vmatpush1.xpose.msra.mxu0 0.0
    %125 = vmatprep.subr.mxu0 0.0
    %126 = vmatpush1.xpose.msra.mxu0 0.0
    %127 = vmatprep.subr.mxu0 0.0
    %128 = vmatpush1.xpose.msra.mxu0 0.0
    %129 = vmatprep.subr.mxu0 0.0
    %130 = vmatpush1.xpose.msra.mxu0 0.0
    %131 = vmatprep.subr.mxu0 0.0
    %132 = vmatpush1.xpose.msra.mxu0 0.0
    %133 = vmatprep.subr.mxu0 0.0
    %134 = vmatpush1.xpose.msra.mxu0 0.0
    %135 = vmatprep.subr.mxu0 0.0
    %136 = vmatpush1.xpose.msra.mxu0 0.0
    %137 = vmatprep.subr.mxu0 0.0
    %138 = vmatpush1.xpose.msra.mxu0 0.0
    %139 = vmatprep.subr.mxu0 0.0
    %140 = vmatpush1.xpose.msra.mxu0 0.0
    %141 = vmatprep.subr.mxu0 %v84
    %142 = vmatpush1.xpose.msra.mxu0 %v76
    %143 = vmatprep.subr.mxu0 0.0
    %144 = vmatpush2.xpose.msra.mxu0 0.0
    %145 = vmatprep.subr.mxu0 0.0
    %146 = vmatpush2.xpose.msra.mxu0 0.0
    %147 = vmatprep.subr.mxu0 0.0
    %148 = vmatpush2.xpose.msra.mxu0 0.0
    %149 = vmatprep.subr.mxu0 0.0
    %150 = vmatpush2.xpose.msra.mxu0 0.0
    %151 = vmatprep.subr.mxu0 0.0
    %152 = vmatpush2.xpose.msra.mxu0 0.0
    %153 = vmatprep.subr.mxu0 0.0
    %154 = vmatpush2.xpose.msra.mxu0 0.0
    %155 = vmatprep.subr.mxu0 0.0
    %156 = vmatpush2.xpose.msra.mxu0 0.0
    %157 = vmatprep.subr.mxu0 0.0
    %158 = vmatpush2.xpose.msra.mxu0 0.0
    %159 = vmatprep.subr.mxu0 0.0
    %160 = vmatpush2.xpose.msra.mxu0 0.0
    %161 = vmatprep.subr.mxu0 0.0
    %162 = vmatpush2.xpose.msra.mxu0 0.0
    %163 = vmatprep.subr.mxu0 0.0
    %164 = vmatpush2.xpose.msra.mxu0 0.0
    %165 = vmatprep.subr.mxu0 0.0
    %166 = vmatpush2.xpose.msra.mxu0 0.0
    %167 = vmatprep.subr.mxu0 0.0
    %168 = vmatpush2.xpose.msra.mxu0 0.0
    %169 = vmatprep.subr.mxu0 0.0
    %170 = vmatpush2.xpose.msra.mxu0 0.0
    %171 = vmatprep.subr.mxu0 0.0
    %172 = vmatpush2.xpose.msra.mxu0 0.0
    %173 = vmatprep.subr.mxu0 0.0
    %174 = vmatpush2.xpose.msra.mxu0 0.0
    %175 = vmatprep.mubr.f32.mxu0 %v34
    %176 = vmatmul.mubr.f32.gmra.mxu0 %v30
    %v177 = vpop.f32.mrf.mxu0
    %v178 = vadd.f32 0.0, %v177
    %v179 = vpop.f32.mrf.mxu0
    %180 = vdwg.mxu0
    %181 = vmatprep.subr.mxu0 0.0
    %182 = vmatpush1.xpose.msra.mxu0 0.0
    %183 = vmatprep.subr.mxu0 0.0
    %184 = vmatpush1.xpose.msra.mxu0 0.0
    %185 = vmatprep.subr.mxu0 0.0
    %186 = vmatpush1.xpose.msra.mxu0 0.0
    %187 = vmatprep.subr.mxu0 0.0
    %188 = vmatpush1.xpose.msra.mxu0 0.0
    %189 = vmatprep.subr.mxu0 0.0
    %190 = vmatpush1.xpose.msra.mxu0 0.0
    %191 = vmatprep.subr.mxu0 0.0
    %192 = vmatpush1.xpose.msra.mxu0 0.0
    %193 = vmatprep.subr.mxu0 0.0
    %194 = vmatpush1.xpose.msra.mxu0 0.0
    %195 = vmatprep.subr.mxu0 0.0
    %196 = vmatpush1.xpose.msra.mxu0 0.0
    %197 = vmatprep.subr.mxu0 0.0
    %198 = vmatpush1.xpose.msra.mxu0 0.0
    %199 = vmatprep.subr.mxu0 0.0
    %200 = vmatpush1.xpose.msra.mxu0 0.0
    %201 = vmatprep.subr.mxu0 0.0
    %202 = vmatpush1.xpose.msra.mxu0 0.0
    %203 = vmatprep.subr.mxu0 0.0
    %204 = vmatpush1.xpose.msra.mxu0 0.0
    %205 = vmatprep.subr.mxu0 0.0
    %206 = vmatpush1.xpose.msra.mxu0 0.0
    %207 = vmatprep.subr.mxu0 0.0
    %208 = vmatpush1.xpose.msra.mxu0 0.0
    %209 = vmatprep.subr.mxu0 0.0
    %210 = vmatpush1.xpose.msra.mxu0 0.0
    %211 = vmatprep.subr.mxu0 %v85
    %212 = vmatpush1.xpose.msra.mxu0 %v83
    %213 = vmatprep.subr.mxu0 0.0
    %214 = vmatpush2.xpose.msra.mxu0 0.0
    %215 = vmatprep.subr.mxu0 0.0
    %216 = vmatpush2.xpose.msra.mxu0 0.0
    %217 = vmatprep.subr.mxu0 0.0
    %218 = vmatpush2.xpose.msra.mxu0 0.0
    %219 = vmatprep.subr.mxu0 0.0
    %220 = vmatpush2.xpose.msra.mxu0 0.0
    %221 = vmatprep.subr.mxu0 0.0
    %222 = vmatpush2.xpose.msra.mxu0 0.0
    %223 = vmatprep.subr.mxu0 0.0
    %224 = vmatpush2.xpose.msra.mxu0 0.0
    %225 = vmatprep.subr.mxu0 0.0
    %226 = vmatpush2.xpose.msra.mxu0 0.0
    %227 = vmatprep.subr.mxu0 0.0
    %228 = vmatpush2.xpose.msra.mxu0 0.0
    %229 = vmatprep.subr.mxu0 0.0
    %230 = vmatpush2.xpose.msra.mxu0 0.0
    %231 = vmatprep.subr.mxu0 0.0
    %232 = vmatpush2.xpose.msra.mxu0 0.0
    %233 = vmatprep.subr.mxu0 0.0
    %234 = vmatpush2.xpose.msra.mxu0 0.0
    %235 = vmatprep.subr.mxu0 0.0
    %236 = vmatpush2.xpose.msra.mxu0 0.0
    %237 = vmatprep.subr.mxu0 0.0
    %238 = vmatpush2.xpose.msra.mxu0 0.0
    %239 = vmatprep.subr.mxu0 0.0
    %240 = vmatpush2.xpose.msra.mxu0 0.0
    %241 = vmatprep.subr.mxu0 0.0
    %242 = vmatpush2.xpose.msra.mxu0 0.0
    %243 = vmatprep.subr.mxu0 0.0
    %244 = vmatpush2.xpose.msra.mxu0 0.0
    %245 = vmatprep.mubr.f32.mxu0 %v42
    %246 = vmatmul.mubr.f32.gmra.mxu0 %v38
    %v247 = vpop.f32.mrf.mxu0
    %v248 = vadd.f32 %v178, %v247
    %v249 = vpop.f32.mrf.mxu0
    %250 = vdwg.mxu0
    %251 = vmatprep.subr.mxu0 0.0
    %252 = vmatpush1.xpose.msra.mxu0 0.0
    %253 = vmatprep.subr.mxu0 0.0
    %254 = vmatpush1.xpose.msra.mxu0 0.0
    %255 = vmatprep.subr.mxu0 0.0
    %256 = vmatpush1.xpose.msra.mxu0 0.0
    %257 = vmatprep.subr.mxu0 0.0
    %258 = vmatpush1.xpose.msra.mxu0 0.0
    %259 = vmatprep.subr.mxu0 0.0
    %260 = vmatpush1.xpose.msra.mxu0 0.0
    %261 = vmatprep.subr.mxu0 0.0
    %262 = vmatpush1.xpose.msra.mxu0 0.0
    %263 = vmatprep.subr.mxu0 0.0
    %264 = vmatpush1.xpose.msra.mxu0 0.0
    %265 = vmatprep.subr.mxu0 0.0
    %266 = vmatpush1.xpose.msra.mxu0 0.0
    %267 = vmatprep.subr.mxu0 0.0
    %268 = vmatpush1.xpose.msra.mxu0 0.0
    %269 = vmatprep.subr.mxu0 0.0
    %270 = vmatpush1.xpose.msra.mxu0 0.0
    %271 = vmatprep.subr.mxu0 0.0
    %272 = vmatpush1.xpose.msra.mxu0 0.0
    %273 = vmatprep.subr.mxu0 0.0
    %274 = vmatpush1.xpose.msra.mxu0 0.0
    %275 = vmatprep.subr.mxu0 0.0
    %276 = vmatpush1.xpose.msra.mxu0 0.0
    %277 = vmatprep.subr.mxu0 0.0
    %278 = vmatpush1.xpose.msra.mxu0 0.0
    %279 = vmatprep.subr.mxu0 0.0
    %280 = vmatpush1.xpose.msra.mxu0 0.0
    %281 = vmatprep.subr.mxu0 %v101
    %282 = vmatpush1.xpose.msra.mxu0 %v93
    %283 = vmatprep.subr.mxu0 0.0
    %284 = vmatpush2.xpose.msra.mxu0 0.0
    %285 = vmatprep.subr.mxu0 0.0
    %286 = vmatpush2.xpose.msra.mxu0 0.0
    %287 = vmatprep.subr.mxu0 0.0
    %288 = vmatpush2.xpose.msra.mxu0 0.0
    %289 = vmatprep.subr.mxu0 0.0
    %290 = vmatpush2.xpose.msra.mxu0 0.0
    %291 = vmatprep.subr.mxu0 0.0
    %292 = vmatpush2.xpose.msra.mxu0 0.0
    %293 = vmatprep.subr.mxu0 0.0
    %294 = vmatpush2.xpose.msra.mxu0 0.0
    %295 = vmatprep.subr.mxu0 0.0
    %296 = vmatpush2.xpose.msra.mxu0 0.0
    %297 = vmatprep.subr.mxu0 0.0
    %298 = vmatpush2.xpose.msra.mxu0 0.0
    %299 = vmatprep.subr.mxu0 0.0
    %300 = vmatpush2.xpose.msra.mxu0 0.0
    %301 = vmatprep.subr.mxu0 0.0
    %302 = vmatpush2.xpose.msra.mxu0 0.0
    %303 = vmatprep.subr.mxu0 0.0
    %304 = vmatpush2.xpose.msra.mxu0 0.0
    %305 = vmatprep.subr.mxu0 0.0
    %306 = vmatpush2.xpose.msra.mxu0 0.0
    %307 = vmatprep.subr.mxu0 0.0
    %308 = vmatpush2.xpose.msra.mxu0 0.0
    %309 = vmatprep.subr.mxu0 0.0
    %310 = vmatpush2.xpose.msra.mxu0 0.0
    %311 = vmatprep.subr.mxu0 0.0
    %312 = vmatpush2.xpose.msra.mxu0 0.0
    %313 = vmatprep.subr.mxu0 0.0
    %314 = vmatpush2.xpose.msra.mxu0 0.0
    %315 = vmatprep.mubr.f32.mxu0 %v50
    %316 = vmatmul.mubr.f32.gmra.mxu0 %v46
    %v317 = vpop.f32.mrf.mxu0
    %v318 = vadd.f32 %v248, %v317
    %v319 = vpop.f32.mrf.mxu0
    %320 = vdwg.mxu0
    %321 = vmatprep.subr.mxu0 0.0
    %322 = vmatpush1.xpose.msra.mxu0 0.0
    %323 = vmatprep.subr.mxu0 0.0
    %324 = vmatpush1.xpose.msra.mxu0 0.0
    %325 = vmatprep.subr.mxu0 0.0
    %326 = vmatpush1.xpose.msra.mxu0 0.0
    %327 = vmatprep.subr.mxu0 0.0
    %328 = vmatpush1.xpose.msra.mxu0 0.0
    %329 = vmatprep.subr.mxu0 0.0
    %330 = vmatpush1.xpose.msra.mxu0 0.0
    %331 = vmatprep.subr.mxu0 0.0
    %332 = vmatpush1.xpose.msra.mxu0 0.0
    %333 = vmatprep.subr.mxu0 0.0
    %334 = vmatpush1.xpose.msra.mxu0 0.0
    %335 = vmatprep.subr.mxu0 0.0
    %336 = vmatpush1.xpose.msra.mxu0 0.0
    %337 = vmatprep.subr.mxu0 0.0
    %338 = vmatpush1.xpose.msra.mxu0 0.0
    %339 = vmatprep.subr.mxu0 0.0
    %340 = vmatpush1.xpose.msra.mxu0 0.0
    %341 = vmatprep.subr.mxu0 0.0
    %342 = vmatpush1.xpose.msra.mxu0 0.0
    %343 = vmatprep.subr.mxu0 0.0
    %344 = vmatpush1.xpose.msra.mxu0 0.0
    %345 = vmatprep.subr.mxu0 0.0
    %346 = vmatpush1.xpose.msra.mxu0 0.0
    %347 = vmatprep.subr.mxu0 0.0
    %348 = vmatpush1.xpose.msra.mxu0 0.0
    %349 = vmatprep.subr.mxu0 0.0
    %350 = vmatpush1.xpose.msra.mxu0 0.0
    %351 = vmatprep.subr.mxu0 %v102
    %352 = vmatpush1.xpose.msra.mxu0 %v100
    %353 = vmatprep.subr.mxu0 0.0
    %354 = vmatpush2.xpose.msra.mxu0 0.0
    %355 = vmatprep.subr.mxu0 0.0
    %356 = vmatpush2.xpose.msra.mxu0 0.0
    %357 = vmatprep.subr.mxu0 0.0
    %358 = vmatpush2.xpose.msra.mxu0 0.0
    %359 = vmatprep.subr.mxu0 0.0
    %360 = vmatpush2.xpose.msra.mxu0 0.0
    %361 = vmatprep.subr.mxu0 0.0
    %362 = vmatpush2.xpose.msra.mxu0 0.0
    %363 = vmatprep.subr.mxu0 0.0
    %364 = vmatpush2.xpose.msra.mxu0 0.0
    %365 = vmatprep.subr.mxu0 0.0
    %366 = vmatpush2.xpose.msra.mxu0 0.0
    %367 = vmatprep.subr.mxu0 0.0
    %368 = vmatpush2.xpose.msra.mxu0 0.0
    %369 = vmatprep.subr.mxu0 0.0
    %370 = vmatpush2.xpose.msra.mxu0 0.0
    %371 = vmatprep.subr.mxu0 0.0
    %372 = vmatpush2.xpose.msra.mxu0 0.0
    %373 = vmatprep.subr.mxu0 0.0
    %374 = vmatpush2.xpose.msra.mxu0 0.0
    %375 = vmatprep.subr.mxu0 0.0
    %376 = vmatpush2.xpose.msra.mxu0 0.0
    %377 = vmatprep.subr.mxu0 0.0
    %378 = vmatpush2.xpose.msra.mxu0 0.0
    %379 = vmatprep.subr.mxu0 0.0
    %380 = vmatpush2.xpose.msra.mxu0 0.0
    %381 = vmatprep.subr.mxu0 0.0
    %382 = vmatpush2.xpose.msra.mxu0 0.0
    %383 = vmatprep.subr.mxu0 0.0
    %384 = vmatpush2.xpose.msra.mxu0 0.0
    %385 = vmatprep.mubr.f32.mxu0 %v58
    %386 = vmatmul.mubr.f32.gmra.mxu0 %v54
    %v387 = vpop.f32.mrf.mxu0
    %v388 = vadd.f32 %v318, %v387
    %v389 = vpop.f32.mrf.mxu0
    %390 = vdwg.mxu0
    %v391 = vadd.f32 %v25, %v388
    %vm392 = vcmask 8192
    %393 = vst.msk [vmem:[#allocation2] sm:$0x1] %vm392, %v391
    // Predicated region
    $region18: #{classifier_forward.1} parent=1 // pred_check
      %p394 = pneg %p16
    $region19: #{classifier_forward.1} parent=1 // pred_check_branch
      %396 = sbr.rel (%p394) target = $region21
    $region20: #{classifier_forward.1} parent=1 // pred_region
      %v397 = vld [vmem:[#allocation2] sm:$0x1]
      %s398 = sld [smem:[#allocation3]]
      %v399 = vstv %s398
      %v400 = vadd.f32 %v397, %v399
      %v401 = vxor.u32 %v400, 2147483648
      %v402 = vmul.f32 %v401, 1.442695
      %v403 = vpow.pop %v402
      %v404 = vadd.f32 %v403, 1.0
      %v405 = vrcp.pop %v404
      %v406 = vmul.f32 1.0, %v405
      %407 = vst.msk [vmem:[#allocation4] sm:$0x1] %vm392, %v406
    $region21: #{classifier_forward.1} parent=1 // pred_fallthru
      _
    // Predicated region
    $region22: #{classifier_forward.1} parent=1 // pred_check
      _
    $region23: #{classifier_forward.1} parent=1 // pred_check_branch
      %409 = sbr.rel (0) target = $region25
    $region24: #{classifier_forward.1} parent=1 // pred_region
      %s411 = ssub.s32 16, 16
      %412 = vsyncadd [#allocation5], %s411
      %s414 = sshll.u32 [#allocation4], 4
      %s415 = int_to_ptr.vmem [resolvable:$true] %s414
      %417 = dma.vmem_to_hbm [thread:$0]  %s415, 16, %s3, [#allocation5]
    $region25: #{classifier_forward.1} parent=1 // pred_fallthru
      _
    // Predicated region
    $region26: #{classifier_forward.1} parent=1 // pred_check
      _
    $region27: #{classifier_forward.1} parent=1 // pred_check_branch
      %419 = sbr.rel (0) target = $region29
    $region28: #{classifier_forward.1} parent=1 // pred_region
      %420 = dma.done [#allocation5], 16
    $region29: #{classifier_forward.1} parent=1 // pred_fallthru
      _
    %421 = vsyncpa [#allocation5], 1

</llo_original>
